<compile_context>
chip_gen: v7x
topology: tpu7x:2x2x1
jax: 0.10.0
libtpu: 0.0.40
codegen_flags: <defaults>
</compile_context>

<pallas_src>
import math

import jax
import jax.numpy as jnp
from jax.experimental import pallas as pl
from jax.experimental.pallas import tpu as pltpu


def _gated_connector_kernel(gate_ref, x_ref, o_ref):
    # gate_ref: (1, W) pre-computed tanh(alpha) row (lane-tiled if folded);
    # x_ref / o_ref: (tile_rows, W).  Single VPU multiply with a sublane
    # broadcast of the gate row; no transcendentals in the kernel.
    o_ref[...] = (x_ref[...] * gate_ref[...]).astype(o_ref.dtype)


def _chip_budgets():
    """Per-chip-generation (block_bytes, vmem_limit_bytes), queried at trace time."""
    vmem_bytes = None
    try:
        info = pltpu.get_tpu_info()
        for attr in ("vmem_capacity_bytes", "vmem_size_bytes", "vmem_bytes"):
            v = getattr(info, attr, None)
            if isinstance(v, int) and v > 0:
                vmem_bytes = v
                break
    except Exception:
        vmem_bytes = None
    if vmem_bytes is None:
        vmem_bytes = 64 * 1024 * 1024  # conservative: assume the smallest (v7x)

    if vmem_bytes <= 64 * 1024 * 1024:
        # v7x: 64 MiB VMEM per TensorCore.  6 MiB blocks -> (x + out) x 2
        # pipeline buffers = 24 MiB; per-step time ~2 us at ~3.2 TB/s HBM.
        return 6 * 1024 * 1024, 40 * 1024 * 1024
    # v5e / v6e: 128 MiB physical VMEM.  8 MiB blocks -> 32 MiB of pipeline
    # buffers.  NOTE: 64 MiB is ABOVE v5e's 16 MiB scoped default and only
    # works because it is set explicitly here -- keep it explicit.
    return 8 * 1024 * 1024, 64 * 1024 * 1024


def _choose_pack(n_rows: int, dim: int, target_lanes: int = 4096) -> int:
    """Largest `pack` with n_rows % pack == 0, (pack*dim) % 128 == 0 and
    pack*dim <= target_lanes.  Returns 1 when dim is already a multiple of 128
    (output already lane-dense; un-folded rows tile more evenly) or when no
    lane-dense fold exists (correct fallback, masked stores)."""
    if dim % 128 == 0:
        return 1
    base = 128 // math.gcd(dim, 128)
    max_pack = max(1, target_lanes // dim)
    best = 0
    p = base
    while p <= max_pack:
        if n_rows % p == 0:
            best = p
        p += base
    return best if best else 1


def _choose_tile_rows(n_rows2: int, lane_w: int, itemsize: int,
                      block_bytes: int, sub: int) -> int:
    """Row-tile size: sub-aligned, <= block_bytes per block, and (when the
    shape allows) producing a grid that is even or deep (>= 8 steps) so v7x's
    two TensorCores stay balanced."""
    if n_rows2 < 2 * sub:
        return n_rows2  # single full-extent block (always legal)

    rows_per_block = block_bytes // (lane_w * itemsize)
    rows_per_block = max(sub, (rows_per_block // sub) * sub)
    # Sub-aligned tile that guarantees at least 2 grid steps.
    half_tile = (((n_rows2 + 1) // 2) + sub - 1) // sub * sub
    tile = min(rows_per_block, half_tile)

    # Shrink (by `sub`) until the grid step count is even or >= 8.
    best = tile
    t = tile
    while t >= sub:
        g = pl.cdiv(n_rows2, t)
        if g >= 8 or g % 2 == 0:
            best = t
            break
        t -= sub
    return best


def gated_connector(
    x: jax.Array,
    alpha: jax.Array,
    *,
    block_bytes: int | None = None,
    vmem_limit_bytes: int | None = None,
    target_lanes: int = 4096,
) -> jax.Array:
    """Computes tanh(alpha) * x with alpha broadcast over x's last axis."""
    dim = alpha.shape[-1]
    assert x.shape[-1] == dim, "last axis of x must equal alpha dim"
    alpha = alpha.reshape(dim)

    chip_block, chip_vmem = _chip_budgets()
    if block_bytes is None:
        block_bytes = chip_block
    if vmem_limit_bytes is None:
        vmem_limit_bytes = chip_vmem

    out_dtype = jnp.promote_types(x.dtype, alpha.dtype)
    orig_shape = x.shape
    n_rows = math.prod(x.shape[:-1]) if x.ndim > 1 else 1

    # Fold `pack` consecutive rows into the lane axis -> lane-dense last dim
    # (skipped when dim is already a multiple of 128).
    pack = _choose_pack(n_rows, dim, target_lanes)
    lane_w = pack * dim
    n_rows2 = n_rows // pack

    x2 = x.reshape(n_rows2, lane_w)

    # Hoist the transcendental: tanh of the tiny (dim,) parameter is computed
    # once in the wrapper (in f32, then cast) and streamed in as one row.
    gate = jnp.tanh(alpha.astype(jnp.float32)).astype(out_dtype).reshape(1, dim)
    if pack > 1:
        gate = jnp.tile(gate, (1, pack))  # (1, lane_w)

    # Sublane packing requirement per dtype: f32 -> 8, bf16 -> 16, 8-bit -> 32.
    x_itemsize = x.dtype.itemsize
    out_itemsize = jnp.dtype(out_dtype).itemsize
    sub = max(8, 32 // x_itemsize, 32 // out_itemsize)
    blk_itemsize = max(x_itemsize, out_itemsize)

    tile_rows = _choose_tile_rows(n_rows2, lane_w, blk_itemsize, block_bytes, sub)
    grid = pl.cdiv(n_rows2, tile_rows)

    bytes_accessed = (
        n_rows2 * lane_w * x_itemsize        # read x
        + n_rows2 * lane_w * out_itemsize    # write out
        + lane_w * out_itemsize              # read gate
    )
    cost = pl.CostEstimate(
        flops=int(n_rows2 * lane_w),     # one multiply per element
        transcendentals=0,               # tanh hoisted to the wrapper
        bytes_accessed=int(bytes_accessed),
    )

    out2 = pl.pallas_call(
        _gated_connector_kernel,
        out_shape=jax.ShapeDtypeStruct((n_rows2, lane_w), out_dtype),
        grid_spec=pltpu.PrefetchScalarGridSpec(
            num_scalar_prefetch=0,
            grid=(grid,),
            in_specs=[
                # gate: same (1, lane_w) block for every grid step.
                pl.BlockSpec((1, lane_w), lambda i: (0, 0)),
                # x: one row-tile per grid step.
                pl.BlockSpec((tile_rows, lane_w), lambda i: (i, 0)),
            ],
            out_specs=pl.BlockSpec((tile_rows, lane_w), lambda i: (i, 0)),
        ),
        compiler_params=pltpu.CompilerParams(
            dimension_semantics=("parallel",),
            vmem_limit_bytes=vmem_limit_bytes,
        ),
        cost_estimate=cost,
    )(gate, x2)

    return out2.reshape(orig_shape)


if __name__ == "__main__":
    key = jax.random.PRNGKey(0)
    (k_alpha, k_x, k_alpha2, k_x2,
     k_alpha3, k_x3, k_alpha4, k_x4) = jax.random.split(key, 8)

    # --- Case 1: shapes implied by the module (batch=2, seq=8, dim=32), f32.
    dim = 32
    x = jax.random.normal(k_x, (2, 8, dim), dtype=jnp.float32)
    alpha = 0.1 * jax.random.normal(k_alpha, (dim,), dtype=jnp.float32)
    out = jax.block_until_ready(gated_connector(x, alpha))
    ref = jnp.tanh(alpha) * x
    assert out.shape == x.shape and out.dtype == x.dtype
    assert jnp.allclose(out, ref, atol=1e-6, rtol=1e-6), "case 1 mismatch"

    # Module default: alpha = zeros -> output zeros.
    out_zero = jax.block_until_ready(gated_connector(x, jnp.zeros((dim,), jnp.float32)))
    assert jnp.allclose(out_zero, jnp.zeros_like(x)), "zero-alpha gate failed"

    # --- Case 2: dim % 128 == 0 -> no fold, multi-step even grid.
    dim2 = 256
    x_b = jax.random.normal(k_x2, (4, 128, dim2), dtype=jnp.float32)
    alpha_b = 0.05 * jax.random.normal(k_alpha2, (dim2,), dtype=jnp.float32)
    out_b = jax.block_until_ready(gated_connector(x_b, alpha_b))
    ref_b = jnp.tanh(alpha_b) * x_b
    assert jnp.allclose(out_b, ref_b, atol=1e-6, rtol=1e-6), "case 2 mismatch"

    # --- Case 3: bf16 input (16-row sublane packing path, lane fold).
    dim3 = 64
    x_c = jax.random.normal(k_x3, (2, 16, dim3), dtype=jnp.float32).astype(jnp.bfloat16)
    alpha_c = (0.1 * jax.random.normal(k_alpha3, (dim3,), dtype=jnp.float32)).astype(jnp.bfloat16)
    out_c = jax.block_until_ready(gated_connector(x_c, alpha_c))
    ref_c = (jnp.tanh(alpha_c) * x_c).astype(jnp.bfloat16)
    assert out_c.dtype == jnp.bfloat16
    assert jnp.allclose(out_c.astype(jnp.float32), ref_c.astype(jnp.float32),
                        atol=2e-2, rtol=2e-2), "case 3 mismatch"

    # --- Case 4: awkward shape (no lane-dense fold) -> correct fallback path.
    dim4 = 48
    x_d = jax.random.normal(k_x4, (3, 5, dim4), dtype=jnp.float32)
    alpha_d = 0.2 * jax.random.normal(k_alpha4, (dim4,), dtype=jnp.float32)
    out_d = jax.block_until_ready(gated_connector(x_d, alpha_d))
    ref_d = jnp.tanh(alpha_d) * x_d
    assert jnp.allclose(out_d, ref_d, atol=1e-6, rtol=1e-6), "case 4 mismatch"

    print("KERNEL_OK")
</pallas_src>

<mosaic_0001>
module attributes {stable_mosaic.version = 11 : i64} {
  func.func @_gated_connector_kernel(%arg0: i32, %arg1: memref<1x512xf32, #tpu.memory_space<vmem>>, %arg2: memref<1x512xf32, #tpu.memory_space<vmem>>, %arg3: memref<1x512xf32, #tpu.memory_space<vmem>>) attributes {dimension_semantics = [#tpu.dimension_semantics<parallel>], iteration_bounds = array<i64: 1>, scalar_prefetch = 0 : i64, scratch_operands = 0 : i64, tpu.core_type = #tpu.core_type<tc>, window_params = [{pipeline_mode = #tpu.pipeline_mode<synchronous>, transform_indices = @transform_0, window_bounds = array<i64: 1, 512>}, {transform_indices = @transform_1, window_bounds = array<i64: 1, 512>}, {transform_indices = @transform_2, window_bounds = array<i64: 1, 512>}]} {
    %c0 = arith.constant 0 : index
    %c0_0 = arith.constant 0 : index
    %0 = vector.load %arg2[%c0, %c0_0] : memref<1x512xf32, #tpu.memory_space<vmem>>, vector<1x512xf32>
    %c0_1 = arith.constant 0 : index
    %c0_2 = arith.constant 0 : index
    %1 = vector.load %arg1[%c0_1, %c0_2] : memref<1x512xf32, #tpu.memory_space<vmem>>, vector<1x512xf32>
    %2 = arith.mulf %0, %1 : vector<1x512xf32>
    %c0_3 = arith.constant 0 : index
    %c0_4 = arith.constant 0 : index
    %3 = vector.load %arg3[%c0_3, %c0_4] : memref<1x512xf32, #tpu.memory_space<vmem>>, vector<1x512xf32>
    tpu.vector_store %arg3[%c0_3, %c0_4], %2 {strides = array<i32>} : memref<1x512xf32, #tpu.memory_space<vmem>>, vector<1x512xf32>,
    return
  }
  func.func @transform_0(%arg0: i32) -> (i32, i32) {
    %c0_i32 = arith.constant 0 : i32
    %c0_i32_0 = arith.constant 0 : i32
    %c0_i32_1 = arith.constant 0 : i32
    return %c0_i32, %c0_i32_0 : i32, i32
  }
  func.func @transform_1(%arg0: i32) -> (i32, i32) {
    %c0_i32 = arith.constant 0 : i32
    %c0_i32_0 = arith.constant 0 : i32
    return %arg0, %c0_i32 : i32, i32
  }
  func.func @transform_2(%arg0: i32) -> (i32, i32) {
    %c0_i32 = arith.constant 0 : i32
    %c0_i32_0 = arith.constant 0 : i32
    return %arg0, %c0_i32 : i32, i32
  }
}

</mosaic_0001>

<llo_original>
// kernel: tpu_custom_call.1
$region0: #{tpu_custom_call.1}
  #allocation0 [shape = 'u32[]', space=smem, size = 0x4, offset = 0x4, fixed_abs, tag = 'smem constant byte address 0x4 - core index']
  #allocation1 [shape = 'u32[144,128]{1,0:T(1,128)}', space=vmem, size = 0x12000, scoped, tag = 'internal scratch']
  %s0 = inlined_call_operand.hbm [shape: f32[1,512], index: 0, kind: input, shape index: {}]
  %s1 = inlined_call_operand.hbm [shape: f32[1,512], index: 1, kind: input, shape index: {}]
  %s2 = inlined_call_operand.hbm [shape: f32[1,512], index: 2, kind: output, shape index: {}]
  %s3 = sld [smem:[#allocation0]]
  $region26: #{tpu_custom_call.1} parent=0
    _
  %s5 = ssub.s32 1, %s3
  %s6 = scalar_select 0, %s5, %s3
  $region1: #{tpu_custom_call.1} parent=0
    #allocation2 [shape = 'u8[2048]{0}', space=vmem, size = 0x800, scoped, tag = 'input window, operand 0, single buffered']
    #allocation3 [shape = 's32[1]{0}', space=sflag, size = 0x4, scoped, tag = 'scoped memory for tpu_custom_call.1']
    #allocation4 [shape = 's32[1]{0}', space=sflag, size = 0x4, scoped, tag = 'scoped memory for tpu_custom_call.1']
    #allocation5 [shape = 'u8[2048]{0}', space=vmem, size = 0x800, scoped, tag = 'input window, operand 1, single buffered']
    #allocation6 [shape = 's32[1]{0}', space=sflag, size = 0x4, scoped, tag = 'scoped memory for tpu_custom_call.1']
    #allocation7 [shape = 'u8[2048]{0}', space=vmem, size = 0x800, scoped, tag = 'output window, operand 0, single buffered']
    %7 = vsyncpa [#allocation3], 0
    %8 = vsyncpa [#allocation6], 0
    %9 = vsyncpa [#allocation4], 0
    // Predicated region
    $region2: #{tpu_custom_call.1} parent=1 // pred_check
      _
    $region3: #{tpu_custom_call.1} parent=1 // pred_check_branch
      %11 = sbr.rel (0) target = $region5
    $region4: #{tpu_custom_call.1} parent=1 // pred_region
      %s13 = ssub.s32 64, 64
      %14 = vsyncadd [#allocation3], %s13
      %s16 = sshll.u32 [#allocation2], 4
      %s17 = int_to_ptr.vmem [resolvable:$true] %s16
      %19 = dma.hbm_to_vmem [thread:$0]  %s0, 64, %s17, [#allocation3]
    $region5: #{tpu_custom_call.1} parent=1 // pred_fallthru
      _
    // Predicated region
    $region6: #{tpu_custom_call.1} parent=1 // pred_check
      _
    $region7: #{tpu_custom_call.1} parent=1 // pred_check_branch
      %21 = sbr.rel (0) target = $region9
    $region8: #{tpu_custom_call.1} parent=1 // pred_region
      %s23 = ssub.s32 64, 64
      %24 = vsyncadd [#allocation6], %s23
      %s26 = sshll.u32 [#allocation5], 4
      %s27 = int_to_ptr.vmem [resolvable:$true] %s26
      %29 = dma.hbm_to_vmem [thread:$0]  %s1, 64, %s27, [#allocation6]
    $region9: #{tpu_custom_call.1} parent=1 // pred_fallthru
      _
    // Predicated region
    $region10: #{tpu_custom_call.1} parent=1 // pred_check
      _
    $region11: #{tpu_custom_call.1} parent=1 // pred_check_branch
      %31 = sbr.rel (0) target = $region13
    $region12: #{tpu_custom_call.1} parent=1 // pred_region
      %32 = dma.done [#allocation3], 64
    $region13: #{tpu_custom_call.1} parent=1 // pred_fallthru
      _
    // Predicated region
    $region14: #{tpu_custom_call.1} parent=1 // pred_check
      _
    $region15: #{tpu_custom_call.1} parent=1 // pred_check_branch
      %34 = sbr.rel (0) target = $region17
    $region16: #{tpu_custom_call.1} parent=1 // pred_region
      %35 = dma.done [#allocation6], 64
    $region17: #{tpu_custom_call.1} parent=1 // pred_fallthru
      _
    %v36 = vld [vmem:[#allocation5] sm:$0xf]
    %v37 = vld [vmem:[#allocation2] sm:$0xf]
    %v38 = vmul.f32 %v36, %v37
    %v39 = vlaneseq
    %vm40 = vcmp.ge.s32.totalorder %v39, 0
    %vm41 = vcmp.lt.s32.totalorder %v39, 512
    %vm42 = vmand %vm40, %vm41
    %43 = vst.msk [vmem:[#allocation7] sm:$0xf] %vm42, %v38
    // Predicated region
    $region18: #{tpu_custom_call.1} parent=1 // pred_check
      _
    $region19: #{tpu_custom_call.1} parent=1 // pred_check_branch
      %45 = sbr.rel (0) target = $region21
    $region20: #{tpu_custom_call.1} parent=1 // pred_region
      %s47 = ssub.s32 64, 64
      %48 = vsyncadd [#allocation4], %s47
      %s50 = sshll.u32 [#allocation7], 4
      %s51 = int_to_ptr.vmem [resolvable:$true] %s50
      %53 = dma.vmem_to_hbm [thread:$0]  %s51, 64, %s2, [#allocation4]
    $region21: #{tpu_custom_call.1} parent=1 // pred_fallthru
      _
    // Predicated region
    $region22: #{tpu_custom_call.1} parent=1 // pred_check
      _
    $region23: #{tpu_custom_call.1} parent=1 // pred_check_branch
      %55 = sbr.rel (0) target = $region25
    $region24: #{tpu_custom_call.1} parent=1 // pred_region
      %56 = dma.done [#allocation4], 64
    $region25: #{tpu_custom_call.1} parent=1 // pred_fallthru
      _
    %57 = vsyncpa [#allocation3], 1
    %58 = vsyncpa [#allocation6], 1
    %59 = vsyncpa [#allocation4], 1

</llo_original>
